<compile_context>
chip_gen: v7x
topology: tpu7x:2x2x1
jax: 0.10.0
libtpu: 0.0.40
codegen_flags: <defaults>
</compile_context>

<pallas_src>
import jax
import jax.numpy as jnp
from jax.experimental import pallas as pl
from jax.experimental.pallas import tpu as pltpu


def _round_up(x: int, m: int) -> int:
    return ((x + m - 1) // m) * m


def _pad2(a, rows: int, cols: int):
    r, c = a.shape
    return jnp.pad(a, ((0, rows - r), (0, cols - c)))


def make_actor_kernel(max_action: float, d1_real: int, d3_real: int, head_pad: int):
    """Kernel body.  max_action and the real (unpadded) feature widths are
    compile-time constants closed over by the kernel."""

    def layernorm(x, g, b, d_real):
        # Padded columns of x are exactly zero (zero weight cols + zero bias),
        # so the sum only sees real columns; the variance term masks (x - mu)
        # on padded columns explicitly.
        d_pad = x.shape[-1]
        inv_d = 1.0 / float(d_real)
        mu = jnp.sum(x, axis=-1, keepdims=True) * inv_d
        diff = x - mu
        if d_pad != d_real:
            mask = jax.lax.broadcasted_iota(jnp.int32, (1, d_pad), 1) < d_real
            diff = jnp.where(mask, diff, 0.0)
        var = jnp.sum(diff * diff, axis=-1, keepdims=True) * inv_d
        x_hat = diff * jax.lax.rsqrt(var + 1e-5)
        return x_hat * g + b

    def kernel(
        state_ref,
        w1_ref, b1_ref, g1_ref, be1_ref,
        w2_ref, b2_ref, g2_ref, be2_ref,
        w3_ref, b3_ref, g3_ref, be3_ref,
        wh_ref, bh_ref,
        out_ref,
    ):
        def linear(x, w_ref, b_ref):
            return jnp.dot(x, w_ref[...], preferred_element_type=jnp.float32) + b_ref[...]

        x = state_ref[...]  # [TB, state_dim] f32

        a = jax.nn.relu(layernorm(linear(x, w1_ref, b1_ref), g1_ref[...], be1_ref[...], d1_real))
        a = jax.nn.relu(layernorm(linear(a, w2_ref, b2_ref), g2_ref[...], be2_ref[...], d1_real))
        a = jax.nn.relu(layernorm(linear(a, w3_ref, b3_ref), g3_ref[...], be3_ref[...], d3_real))

        # Fused heads: one matmul producing [TB, 2*head_pad] (mean | log_std).
        z = linear(a, wh_ref, bh_ref)
        mean = jnp.tanh(z[:, :head_pad]) * max_action
        std = jnp.exp(jnp.clip(z[:, head_pad:], -20.0, 2.0))

        # Lane-aligned (128-multiple) unmasked stores into one output slab.
        out_ref[:, :head_pad] = mean
        out_ref[:, head_pad:] = std

    return kernel


def ppo_actor_forward(state, params, max_action, *, batch_tile: int = 256):
    """state: [B, state_dim] f32.  params: dict of pre-transposed weights."""
    B, state_dim = state.shape
    net_width = params["w1"].shape[1]
    half = params["w3"].shape[1]
    action_dim = params["wm"].shape[1]

    # Pad feature dims to 128-lane multiples (zero padding keeps math exact).
    H1 = _round_up(net_width, 128)
    H3 = _round_up(half, 128)
    AP = _round_up(action_dim, 128)

    w1 = _pad2(params["w1"], state_dim, H1); b1 = _pad2(params["b1"], 1, H1)
    g1 = _pad2(params["g1"], 1, H1);         be1 = _pad2(params["be1"], 1, H1)
    w2 = _pad2(params["w2"], H1, H1);        b2 = _pad2(params["b2"], 1, H1)
    g2 = _pad2(params["g2"], 1, H1);         be2 = _pad2(params["be2"], 1, H1)
    w3 = _pad2(params["w3"], H1, H3);        b3 = _pad2(params["b3"], 1, H3)
    g3 = _pad2(params["g3"], 1, H3);         be3 = _pad2(params["be3"], 1, H3)
    # Fuse mean / log_std heads into one [H3, 2*AP] weight (each head 128-lane aligned).
    wh = jnp.concatenate([_pad2(params["wm"], H3, AP), _pad2(params["ws"], H3, AP)], axis=1)
    bh = jnp.concatenate([_pad2(params["bm"], 1, AP), _pad2(params["bs"], 1, AP)], axis=1)

    # Batch tiling: TB is a multiple of 8; pad B up to a multiple of TB.
    TB = _round_up(min(batch_tile, _round_up(B, 8)), 8)
    Bp = _round_up(B, TB)
    state_p = jnp.pad(state, ((0, Bp - B), (0, 0)))

    weight_args = (w1, b1, g1, be1, w2, b2, g2, be2, w3, b3, g3, be3, wh, bh)

    def const_spec(a):
        # Full-array block, constant index -> resident in VMEM, DMA'd once.
        return pl.BlockSpec(a.shape, lambda i: (0, 0))

    in_specs = [pl.BlockSpec((TB, state_dim), lambda i: (i, 0))]
    in_specs += [const_spec(a) for a in weight_args]
    out_specs = pl.BlockSpec((TB, 2 * AP), lambda i: (i, 0))
    out_shape = jax.ShapeDtypeStruct((Bp, 2 * AP), jnp.float32)

    flops = 2 * Bp * (state_dim * H1 + H1 * H1 + H1 * H3 + H3 * 2 * AP)
    transcendentals = Bp * (3 + 2 * AP)  # 3 rsqrt per row + tanh/exp per head lane
    param_bytes = sum(int(a.size) * 4 for a in weight_args)
    bytes_accessed = 4 * Bp * state_dim + param_bytes + 4 * Bp * 2 * AP

    out = pl.pallas_call(
        make_actor_kernel(float(max_action), net_width, half, AP),
        out_shape=out_shape,
        grid=(Bp // TB,),
        in_specs=in_specs,
        out_specs=out_specs,
        compiler_params=pltpu.CompilerParams(
            dimension_semantics=("parallel",),
        ),
        cost_estimate=pl.CostEstimate(
            flops=int(flops),
            transcendentals=int(transcendentals),
            bytes_accessed=int(bytes_accessed),
        ),
    )(state_p, *weight_args)

    mean = out[:B, :action_dim]
    std = out[:B, AP:AP + action_dim]
    return mean, std


def init_params(key, state_dim, action_dim, net_width):
    """Deterministic synthetic init (uniform, like PyTorch's default Linear init).
    Linear weights are stored pre-transposed as [in, out]; biases / LN params as [1, D]."""
    half = net_width // 2
    keys = jax.random.split(key, 10)

    def lin(kw, kb, din, dout):
        bound = 1.0 / jnp.sqrt(din)
        w = jax.random.uniform(kw, (din, dout), jnp.float32, -bound, bound)
        b = jax.random.uniform(kb, (1, dout), jnp.float32, -bound, bound)
        return w, b

    w1, b1 = lin(keys[0], keys[1], state_dim, net_width)
    w2, b2 = lin(keys[2], keys[3], net_width, net_width)
    w3, b3 = lin(keys[4], keys[5], net_width, half)
    wm, bm = lin(keys[6], keys[7], half, action_dim)
    ws, bs = lin(keys[8], keys[9], half, action_dim)

    params = dict(
        w1=w1, b1=b1, g1=jnp.ones((1, net_width), jnp.float32), be1=jnp.zeros((1, net_width), jnp.float32),
        w2=w2, b2=b2, g2=jnp.ones((1, net_width), jnp.float32), be2=jnp.zeros((1, net_width), jnp.float32),
        w3=w3, b3=b3, g3=jnp.ones((1, half), jnp.float32), be3=jnp.zeros((1, half), jnp.float32),
        wm=wm, bm=bm,
        ws=ws, bs=bs,
    )
    return params


def reference_forward(state, params, max_action):
    """Pure-JAX reference for correctness checking."""
    def ln(x, g, b):
        mu = jnp.mean(x, axis=-1, keepdims=True)
        var = jnp.mean((x - mu) ** 2, axis=-1, keepdims=True)
        return (x - mu) / jnp.sqrt(var + 1e-5) * g + b

    a = jax.nn.relu(ln(state @ params["w1"] + params["b1"], params["g1"], params["be1"]))
    a = jax.nn.relu(ln(a @ params["w2"] + params["b2"], params["g2"], params["be2"]))
    a = jax.nn.relu(ln(a @ params["w3"] + params["b3"], params["g3"], params["be3"]))
    mean = jnp.tanh(a @ params["wm"] + params["bm"]) * max_action
    log_std = jnp.clip(a @ params["ws"] + params["bs"], -20.0, 2.0)
    return mean, jnp.exp(log_std)


if __name__ == "__main__":
    # Small shapes consistent with the module; B chosen NOT a multiple of the
    # batch tile to exercise the batch-pad + multi-step grid path.
    B, state_dim, action_dim, net_width = 20, 16, 4, 64
    max_action = 2.0

    key = jax.random.PRNGKey(0)
    k_params, k_state = jax.random.split(key)
    params = init_params(k_params, state_dim, action_dim, net_width)
    state = jax.random.normal(k_state, (B, state_dim), jnp.float32)

    mean, std = ppo_actor_forward(state, params, max_action, batch_tile=8)
    jax.block_until_ready((mean, std))

    ref_mean, ref_std = reference_forward(state, params, max_action)
    assert mean.shape == (B, action_dim) and std.shape == (B, action_dim)
    assert jnp.allclose(mean, ref_mean, atol=1e-5, rtol=1e-5), "mean mismatch"
    assert jnp.allclose(std, ref_std, atol=1e-5, rtol=1e-5), "std mismatch"

    print("KERNEL_OK")
</pallas_src>

<mosaic_0001>
module attributes {stable_mosaic.version = 11 : i64} {
  func.func @kernel(%arg0: i32, %arg1: memref<8x16xf32, #tpu.memory_space<vmem>>, %arg2: memref<16x128xf32, #tpu.memory_space<vmem>>, %arg3: memref<1x128xf32, #tpu.memory_space<vmem>>, %arg4: memref<1x128xf32, #tpu.memory_space<vmem>>, %arg5: memref<1x128xf32, #tpu.memory_space<vmem>>, %arg6: memref<128x128xf32, #tpu.memory_space<vmem>>, %arg7: memref<1x128xf32, #tpu.memory_space<vmem>>, %arg8: memref<1x128xf32, #tpu.memory_space<vmem>>, %arg9: memref<1x128xf32, #tpu.memory_space<vmem>>, %arg10: memref<128x128xf32, #tpu.memory_space<vmem>>, %arg11: memref<1x128xf32, #tpu.memory_space<vmem>>, %arg12: memref<1x128xf32, #tpu.memory_space<vmem>>, %arg13: memref<1x128xf32, #tpu.memory_space<vmem>>, %arg14: memref<128x256xf32, #tpu.memory_space<vmem>>, %arg15: memref<1x256xf32, #tpu.memory_space<vmem>>, %arg16: memref<8x256xf32, #tpu.memory_space<vmem>>) attributes {dimension_semantics = [#tpu.dimension_semantics<parallel>], iteration_bounds = array<i64: 3>, scalar_prefetch = 0 : i64, scratch_operands = 0 : i64, tpu.core_type = #tpu.core_type<tc>, window_params = [{transform_indices = @transform_0, window_bounds = array<i64: 8, 16>}, {pipeline_mode = #tpu.pipeline_mode<synchronous>, transform_indices = @transform_1, window_bounds = array<i64: 16, 128>}, {pipeline_mode = #tpu.pipeline_mode<synchronous>, transform_indices = @transform_2, window_bounds = array<i64: 1, 128>}, {pipeline_mode = #tpu.pipeline_mode<synchronous>, transform_indices = @transform_3, window_bounds = array<i64: 1, 128>}, {pipeline_mode = #tpu.pipeline_mode<synchronous>, transform_indices = @transform_4, window_bounds = array<i64: 1, 128>}, {pipeline_mode = #tpu.pipeline_mode<synchronous>, transform_indices = @transform_5, window_bounds = array<i64: 128, 128>}, {pipeline_mode = #tpu.pipeline_mode<synchronous>, transform_indices = @transform_6, window_bounds = array<i64: 1, 128>}, {pipeline_mode = #tpu.pipeline_mode<synchronous>, transform_indices = @transform_7, window_bounds = array<i64: 1, 128>}, {pipeline_mode = #tpu.pipeline_mode<synchronous>, transform_indices = @transform_8, window_bounds = array<i64: 1, 128>}, {pipeline_mode = #tpu.pipeline_mode<synchronous>, transform_indices = @transform_9, window_bounds = array<i64: 128, 128>}, {pipeline_mode = #tpu.pipeline_mode<synchronous>, transform_indices = @transform_10, window_bounds = array<i64: 1, 128>}, {pipeline_mode = #tpu.pipeline_mode<synchronous>, transform_indices = @transform_11, window_bounds = array<i64: 1, 128>}, {pipeline_mode = #tpu.pipeline_mode<synchronous>, transform_indices = @transform_12, window_bounds = array<i64: 1, 128>}, {pipeline_mode = #tpu.pipeline_mode<synchronous>, transform_indices = @transform_13, window_bounds = array<i64: 128, 256>}, {pipeline_mode = #tpu.pipeline_mode<synchronous>, transform_indices = @transform_14, window_bounds = array<i64: 1, 256>}, {transform_indices = @transform_15, window_bounds = array<i64: 8, 256>}]} {
    %c0 = arith.constant 0 : index
    %c0_0 = arith.constant 0 : index
    %0 = vector.load %arg1[%c0, %c0_0] : memref<8x16xf32, #tpu.memory_space<vmem>>, vector<8x16xf32>
    %c0_1 = arith.constant 0 : index
    %c0_2 = arith.constant 0 : index
    %1 = vector.load %arg2[%c0_1, %c0_2] : memref<16x128xf32, #tpu.memory_space<vmem>>, vector<16x128xf32>
    %cst = arith.constant dense<0.000000e+00> : vector<8x128xf32>
    %2 = tpu.matmul %0, %1, %cst {dimension_numbers = #tpu.dot_dimension_numbers<[1], [0], [0], [1], [0, 0, 1, 1], [], []>} : vector<8x16xf32>, vector<16x128xf32>, vector<8x128xf32> -> vector<8x128xf32>
    %c0_3 = arith.constant 0 : index
    %c0_4 = arith.constant 0 : index
    %3 = vector.load %arg3[%c0_3, %c0_4] : memref<1x128xf32, #tpu.memory_space<vmem>>, vector<1x128xf32>
    %4 = vector.broadcast %3 : vector<1x128xf32> to vector<8x128xf32>
    %5 = arith.addf %2, %4 : vector<8x128xf32>
    %c0_5 = arith.constant 0 : index
    %c0_6 = arith.constant 0 : index
    %6 = vector.load %arg4[%c0_5, %c0_6] : memref<1x128xf32, #tpu.memory_space<vmem>>, vector<1x128xf32>
    %c0_7 = arith.constant 0 : index
    %c0_8 = arith.constant 0 : index
    %7 = vector.load %arg5[%c0_7, %c0_8] : memref<1x128xf32, #tpu.memory_space<vmem>>, vector<1x128xf32>
    %cst_9 = arith.constant dense<0.000000e+00> : vector<8xf32>
    %8 = vector.multi_reduction <add>, %5, %cst_9 [1] : vector<8x128xf32> to vector<8xf32>
    %9 = vector.shape_cast %8 : vector<8xf32> to vector<8x1xf32>
    %cst_10 = arith.constant 1.562500e-02 : f32
    %10 = vector.broadcast %cst_10 : f32 to vector<8x1xf32>
    %11 = arith.mulf %9, %10 : vector<8x1xf32>
    %12 = vector.broadcast %11 : vector<8x1xf32> to vector<8x128xf32>
    %13 = arith.subf %5, %12 : vector<8x128xf32>
    %14 = tpu.iota {dimensions = array<i32: 1>} : vector<1x128xi32>
    %c64_i32 = arith.constant 64 : i32
    %15 = vector.broadcast %c64_i32 : i32 to vector<1x128xi32>
    %16 = arith.cmpi slt, %14, %15 : vector<1x128xi32>
    %cst_11 = arith.constant 0.000000e+00 : f32
    %17 = vector.shape_cast %16 : vector<1x128xi1> to vector<1x128xi1>
    %18 = vector.broadcast %17 : vector<1x128xi1> to vector<8x128xi1>
    %19 = vector.broadcast %cst_11 : f32 to vector<8x128xf32>
    %20 = arith.select %18, %13, %19 : vector<8x128xi1>, vector<8x128xf32>
    %21 = arith.mulf %20, %20 : vector<8x128xf32>
    %cst_12 = arith.constant dense<0.000000e+00> : vector<8xf32>
    %22 = vector.multi_reduction <add>, %21, %cst_12 [1] : vector<8x128xf32> to vector<8xf32>
    %23 = vector.shape_cast %22 : vector<8xf32> to vector<8x1xf32>
    %cst_13 = arith.constant 1.562500e-02 : f32
    %24 = vector.broadcast %cst_13 : f32 to vector<8x1xf32>
    %25 = arith.mulf %23, %24 : vector<8x1xf32>
    %cst_14 = arith.constant 9.99999974E-6 : f32
    %26 = vector.broadcast %cst_14 : f32 to vector<8x1xf32>
    %27 = arith.addf %25, %26 : vector<8x1xf32>
    %28 = math.rsqrt %27 : vector<8x1xf32>
    %29 = vector.broadcast %28 : vector<8x1xf32> to vector<8x128xf32>
    %30 = arith.mulf %20, %29 : vector<8x128xf32>
    %31 = vector.broadcast %6 : vector<1x128xf32> to vector<8x128xf32>
    %32 = arith.mulf %30, %31 : vector<8x128xf32>
    %33 = vector.broadcast %7 : vector<1x128xf32> to vector<8x128xf32>
    %34 = arith.addf %32, %33 : vector<8x128xf32>
    %cst_15 = arith.constant 0.000000e+00 : f32
    %35 = vector.broadcast %cst_15 : f32 to vector<8x128xf32>
    %36 = arith.maximumf %34, %35 : vector<8x128xf32>
    %c0_16 = arith.constant 0 : index
    %c0_17 = arith.constant 0 : index
    %37 = vector.load %arg6[%c0_16, %c0_17] : memref<128x128xf32, #tpu.memory_space<vmem>>, vector<128x128xf32>
    %cst_18 = arith.constant dense<0.000000e+00> : vector<8x128xf32>
    %38 = tpu.matmul %36, %37, %cst_18 {dimension_numbers = #tpu.dot_dimension_numbers<[1], [0], [0], [1], [0, 0, 1, 1], [], []>} : vector<8x128xf32>, vector<128x128xf32>, vector<8x128xf32> -> vector<8x128xf32>
    %c0_19 = arith.constant 0 : index
    %c0_20 = arith.constant 0 : index
    %39 = vector.load %arg7[%c0_19, %c0_20] : memref<1x128xf32, #tpu.memory_space<vmem>>, vector<1x128xf32>
    %40 = vector.broadcast %39 : vector<1x128xf32> to vector<8x128xf32>
    %41 = arith.addf %38, %40 : vector<8x128xf32>
    %c0_21 = arith.constant 0 : index
    %c0_22 = arith.constant 0 : index
    %42 = vector.load %arg8[%c0_21, %c0_22] : memref<1x128xf32, #tpu.memory_space<vmem>>, vector<1x128xf32>
    %c0_23 = arith.constant 0 : index
    %c0_24 = arith.constant 0 : index
    %43 = vector.load %arg9[%c0_23, %c0_24] : memref<1x128xf32, #tpu.memory_space<vmem>>, vector<1x128xf32>
    %cst_25 = arith.constant dense<0.000000e+00> : vector<8xf32>
    %44 = vector.multi_reduction <add>, %41, %cst_25 [1] : vector<8x128xf32> to vector<8xf32>
    %45 = vector.shape_cast %44 : vector<8xf32> to vector<8x1xf32>
    %cst_26 = arith.constant 1.562500e-02 : f32
    %46 = vector.broadcast %cst_26 : f32 to vector<8x1xf32>
    %47 = arith.mulf %45, %46 : vector<8x1xf32>
    %48 = vector.broadcast %47 : vector<8x1xf32> to vector<8x128xf32>
    %49 = arith.subf %41, %48 : vector<8x128xf32>
    %50 = tpu.iota {dimensions = array<i32: 1>} : vector<1x128xi32>
    %c64_i32_27 = arith.constant 64 : i32
    %51 = vector.broadcast %c64_i32_27 : i32 to vector<1x128xi32>
    %52 = arith.cmpi slt, %50, %51 : vector<1x128xi32>
    %cst_28 = arith.constant 0.000000e+00 : f32
    %53 = vector.shape_cast %52 : vector<1x128xi1> to vector<1x128xi1>
    %54 = vector.broadcast %53 : vector<1x128xi1> to vector<8x128xi1>
    %55 = vector.broadcast %cst_28 : f32 to vector<8x128xf32>
    %56 = arith.select %54, %49, %55 : vector<8x128xi1>, vector<8x128xf32>
    %57 = arith.mulf %56, %56 : vector<8x128xf32>
    %cst_29 = arith.constant dense<0.000000e+00> : vector<8xf32>
    %58 = vector.multi_reduction <add>, %57, %cst_29 [1] : vector<8x128xf32> to vector<8xf32>
    %59 = vector.shape_cast %58 : vector<8xf32> to vector<8x1xf32>
    %cst_30 = arith.constant 1.562500e-02 : f32
    %60 = vector.broadcast %cst_30 : f32 to vector<8x1xf32>
    %61 = arith.mulf %59, %60 : vector<8x1xf32>
    %cst_31 = arith.constant 9.99999974E-6 : f32
    %62 = vector.broadcast %cst_31 : f32 to vector<8x1xf32>
    %63 = arith.addf %61, %62 : vector<8x1xf32>
    %64 = math.rsqrt %63 : vector<8x1xf32>
    %65 = vector.broadcast %64 : vector<8x1xf32> to vector<8x128xf32>
    %66 = arith.mulf %56, %65 : vector<8x128xf32>
    %67 = vector.broadcast %42 : vector<1x128xf32> to vector<8x128xf32>
    %68 = arith.mulf %66, %67 : vector<8x128xf32>
    %69 = vector.broadcast %43 : vector<1x128xf32> to vector<8x128xf32>
    %70 = arith.addf %68, %69 : vector<8x128xf32>
    %cst_32 = arith.constant 0.000000e+00 : f32
    %71 = vector.broadcast %cst_32 : f32 to vector<8x128xf32>
    %72 = arith.maximumf %70, %71 : vector<8x128xf32>
    %c0_33 = arith.constant 0 : index
    %c0_34 = arith.constant 0 : index
    %73 = vector.load %arg10[%c0_33, %c0_34] : memref<128x128xf32, #tpu.memory_space<vmem>>, vector<128x128xf32>
    %cst_35 = arith.constant dense<0.000000e+00> : vector<8x128xf32>
    %74 = tpu.matmul %72, %73, %cst_35 {dimension_numbers = #tpu.dot_dimension_numbers<[1], [0], [0], [1], [0, 0, 1, 1], [], []>} : vector<8x128xf32>, vector<128x128xf32>, vector<8x128xf32> -> vector<8x128xf32>
    %c0_36 = arith.constant 0 : index
    %c0_37 = arith.constant 0 : index
    %75 = vector.load %arg11[%c0_36, %c0_37] : memref<1x128xf32, #tpu.memory_space<vmem>>, vector<1x128xf32>
    %76 = vector.broadcast %75 : vector<1x128xf32> to vector<8x128xf32>
    %77 = arith.addf %74, %76 : vector<8x128xf32>
    %c0_38 = arith.constant 0 : index
    %c0_39 = arith.constant 0 : index
    %78 = vector.load %arg12[%c0_38, %c0_39] : memref<1x128xf32, #tpu.memory_space<vmem>>, vector<1x128xf32>
    %c0_40 = arith.constant 0 : index
    %c0_41 = arith.constant 0 : index
    %79 = vector.load %arg13[%c0_40, %c0_41] : memref<1x128xf32, #tpu.memory_space<vmem>>, vector<1x128xf32>
    %cst_42 = arith.constant dense<0.000000e+00> : vector<8xf32>
    %80 = vector.multi_reduction <add>, %77, %cst_42 [1] : vector<8x128xf32> to vector<8xf32>
    %81 = vector.shape_cast %80 : vector<8xf32> to vector<8x1xf32>
    %cst_43 = arith.constant 3.125000e-02 : f32
    %82 = vector.broadcast %cst_43 : f32 to vector<8x1xf32>
    %83 = arith.mulf %81, %82 : vector<8x1xf32>
    %84 = vector.broadcast %83 : vector<8x1xf32> to vector<8x128xf32>
    %85 = arith.subf %77, %84 : vector<8x128xf32>
    %86 = tpu.iota {dimensions = array<i32: 1>} : vector<1x128xi32>
    %c32_i32 = arith.constant 32 : i32
    %87 = vector.broadcast %c32_i32 : i32 to vector<1x128xi32>
    %88 = arith.cmpi slt, %86, %87 : vector<1x128xi32>
    %cst_44 = arith.constant 0.000000e+00 : f32
    %89 = vector.shape_cast %88 : vector<1x128xi1> to vector<1x128xi1>
    %90 = vector.broadcast %89 : vector<1x128xi1> to vector<8x128xi1>
    %91 = vector.broadcast %cst_44 : f32 to vector<8x128xf32>
    %92 = arith.select %90, %85, %91 : vector<8x128xi1>, vector<8x128xf32>
    %93 = arith.mulf %92, %92 : vector<8x128xf32>
    %cst_45 = arith.constant dense<0.000000e+00> : vector<8xf32>
    %94 = vector.multi_reduction <add>, %93, %cst_45 [1] : vector<8x128xf32> to vector<8xf32>
    %95 = vector.shape_cast %94 : vector<8xf32> to vector<8x1xf32>
    %cst_46 = arith.constant 3.125000e-02 : f32
    %96 = vector.broadcast %cst_46 : f32 to vector<8x1xf32>
    %97 = arith.mulf %95, %96 : vector<8x1xf32>
    %cst_47 = arith.constant 9.99999974E-6 : f32
    %98 = vector.broadcast %cst_47 : f32 to vector<8x1xf32>
    %99 = arith.addf %97, %98 : vector<8x1xf32>
    %100 = math.rsqrt %99 : vector<8x1xf32>
    %101 = vector.broadcast %100 : vector<8x1xf32> to vector<8x128xf32>
    %102 = arith.mulf %92, %101 : vector<8x128xf32>
    %103 = vector.broadcast %78 : vector<1x128xf32> to vector<8x128xf32>
    %104 = arith.mulf %102, %103 : vector<8x128xf32>
    %105 = vector.broadcast %79 : vector<1x128xf32> to vector<8x128xf32>
    %106 = arith.addf %104, %105 : vector<8x128xf32>
    %cst_48 = arith.constant 0.000000e+00 : f32
    %107 = vector.broadcast %cst_48 : f32 to vector<8x128xf32>
    %108 = arith.maximumf %106, %107 : vector<8x128xf32>
    %c0_49 = arith.constant 0 : index
    %c0_50 = arith.constant 0 : index
    %109 = vector.load %arg14[%c0_49, %c0_50] : memref<128x256xf32, #tpu.memory_space<vmem>>, vector<128x256xf32>
    %cst_51 = arith.constant dense<0.000000e+00> : vector<8x256xf32>
    %110 = tpu.matmul %108, %109, %cst_51 {dimension_numbers = #tpu.dot_dimension_numbers<[1], [0], [0], [1], [0, 0, 1, 1], [], []>} : vector<8x128xf32>, vector<128x256xf32>, vector<8x256xf32> -> vector<8x256xf32>
    %c0_52 = arith.constant 0 : index
    %c0_53 = arith.constant 0 : index
    %111 = vector.load %arg15[%c0_52, %c0_53] : memref<1x256xf32, #tpu.memory_space<vmem>>, vector<1x256xf32>
    %112 = vector.broadcast %111 : vector<1x256xf32> to vector<8x256xf32>
    %113 = arith.addf %110, %112 : vector<8x256xf32>
    %114 = vector.extract_strided_slice %113 {offsets = [0, 0], sizes = [8, 128], strides = [1, 1]} : vector<8x256xf32> to vector<8x128xf32>
    %115 = math.tanh %114 : vector<8x128xf32>
    %cst_54 = arith.constant 2.000000e+00 : f32
    %116 = vector.broadcast %cst_54 : f32 to vector<8x128xf32>
    %117 = arith.mulf %115, %116 : vector<8x128xf32>
    %118 = vector.extract_strided_slice %113 {offsets = [0, 128], sizes = [8, 128], strides = [1, 1]} : vector<8x256xf32> to vector<8x128xf32>
    %cst_55 = arith.constant -2.000000e+01 : f32
    %cst_56 = arith.constant 2.000000e+00 : f32
    %119 = vector.broadcast %cst_55 : f32 to vector<8x128xf32>
    %120 = arith.maximumf %119, %118 : vector<8x128xf32>
    %121 = vector.broadcast %cst_56 : f32 to vector<8x128xf32>
    %122 = arith.minimumf %121, %120 : vector<8x128xf32>
    %123 = math.exp %122 : vector<8x128xf32>
    %c0_57 = arith.constant 0 : index
    %c0_58 = arith.constant 0 : index
    %124 = vector.load %arg16[%c0_57, %c0_58] : memref<8x256xf32, #tpu.memory_space<vmem>>, vector<8x128xf32>
    tpu.vector_store %arg16[%c0_57, %c0_58], %117 {strides = array<i32>} : memref<8x256xf32, #tpu.memory_space<vmem>>, vector<8x128xf32>,
    %c0_59 = arith.constant 0 : index
    %c128 = arith.constant 128 : index
    %125 = vector.load %arg16[%c0_59, %c128] : memref<8x256xf32, #tpu.memory_space<vmem>>, vector<8x128xf32>
    tpu.vector_store %arg16[%c0_59, %c128], %123 {strides = array<i32>} : memref<8x256xf32, #tpu.memory_space<vmem>>, vector<8x128xf32>,
    return
  }
  func.func @transform_0(%arg0: i32) -> (i32, i32) {
    %c0_i32 = arith.constant 0 : i32
    %c0_i32_0 = arith.constant 0 : i32
    return %arg0, %c0_i32 : i32, i32
  }
  func.func @transform_1(%arg0: i32) -> (i32, i32) {
    %c0_i32 = arith.constant 0 : i32
    %c0_i32_0 = arith.constant 0 : i32
    %c0_i32_1 = arith.constant 0 : i32
    return %c0_i32, %c0_i32_0 : i32, i32
  }
  func.func @transform_2(%arg0: i32) -> (i32, i32) {
    %c0_i32 = arith.constant 0 : i32
    %c0_i32_0 = arith.constant 0 : i32
    %c0_i32_1 = arith.constant 0 : i32
    return %c0_i32, %c0_i32_0 : i32, i32
  }
  func.func @transform_3(%arg0: i32) -> (i32, i32) {
    %c0_i32 = arith.constant 0 : i32
    %c0_i32_0 = arith.constant 0 : i32
    %c0_i32_1 = arith.constant 0 : i32
    return %c0_i32, %c0_i32_0 : i32, i32
  }
  func.func @transform_4(%arg0: i32) -> (i32, i32) {
    %c0_i32 = arith.constant 0 : i32
    %c0_i32_0 = arith.constant 0 : i32
    %c0_i32_1 = arith.constant 0 : i32
    return %c0_i32, %c0_i32_0 : i32, i32
  }
  func.func @transform_5(%arg0: i32) -> (i32, i32) {
    %c0_i32 = arith.constant 0 : i32
    %c0_i32_0 = arith.constant 0 : i32
    %c0_i32_1 = arith.constant 0 : i32
    return %c0_i32, %c0_i32_0 : i32, i32
  }
  func.func @transform_6(%arg0: i32) -> (i32, i32) {
    %c0_i32 = arith.constant 0 : i32
    %c0_i32_0 = arith.constant 0 : i32
    %c0_i32_1 = arith.constant 0 : i32
    return %c0_i32, %c0_i32_0 : i32, i32
  }
  func.func @transform_7(%arg0: i32) -> (i32, i32) {
    %c0_i32 = arith.constant 0 : i32
    %c0_i32_0 = arith.constant 0 : i32
    %c0_i32_1 = arith.constant 0 : i32
    return %c0_i32, %c0_i32_0 : i32, i32
  }
  func.func @transform_8(%arg0: i32) -> (i32, i32) {
    %c0_i32 = arith.constant 0 : i32
    %c0_i32_0 = arith.constant 0 : i32
    %c0_i32_1 = arith.constant 0 : i32
    return %c0_i32, %c0_i32_0 : i32, i32
  }
  func.func @transform_9(%arg0: i32) -> (i32, i32) {
    %c0_i32 = arith.constant 0 : i32
    %c0_i32_0 = arith.constant 0 : i32
    %c0_i32_1 = arith.constant 0 : i32
    return %c0_i32, %c0_i32_0 : i32, i32
  }
  func.func @transform_10(%arg0: i32) -> (i32, i32) {
    %c0_i32 = arith.constant 0 : i32
    %c0_i32_0 = arith.constant 0 : i32
    %c0_i32_1 = arith.constant 0 : i32
    return %c0_i32, %c0_i32_0 : i32, i32
  }
  func.func @transform_11(%arg0: i32) -> (i32, i32) {
    %c0_i32 = arith.constant 0 : i32
    %c0_i32_0 = arith.constant 0 : i32
    %c0_i32_1 = arith.constant 0 : i32
    return %c0_i32, %c0_i32_0 : i32, i32
  }
  func.func @transform_12(%arg0: i32) -> (i32, i32) {
    %c0_i32 = arith.constant 0 : i32
    %c0_i32_0 = arith.constant 0 : i32
    %c0_i32_1 = arith.constant 0 : i32
    return %c0_i32, %c0_i32_0 : i32, i32
  }
  func.func @transform_13(%arg0: i32) -> (i32, i32) {
    %c0_i32 = arith.constant 0 : i32
    %c0_i32_0 = arith.constant 0 : i32
    %c0_i32_1 = arith.constant 0 : i32
    return %c0_i32, %c0_i32_0 : i32, i32
  }
  func.func @transform_14(%arg0: i32) -> (i32, i32) {
    %c0_i32 = arith.constant 0 : i32
    %c0_i32_0 = arith.constant 0 : i32
    %c0_i32_1 = arith.constant 0 : i32
    return %c0_i32, %c0_i32_0 : i32, i32
  }
  func.func @transform_15(%arg0: i32) -> (i32, i32) {
    %c0_i32 = arith.constant 0 : i32
    %c0_i32_0 = arith.constant 0 : i32
    return %arg0, %c0_i32 : i32, i32
  }
}

</mosaic_0001>

<llo_original>
// kernel: tpu_custom_call.1
$region0: #{tpu_custom_call.1}
  #allocation0 [shape = 'u32[]', space=smem, size = 0x4, offset = 0x4, fixed_abs, tag = 'smem constant byte address 0x4 - core index']
  #allocation1 [shape = 'u32[144,128]{1,0:T(1,128)}', space=vmem, size = 0x12000, scoped, tag = 'internal scratch']
  %s0 = inlined_call_operand.vmem [shape: f32[24,16], index: 0, kind: input, shape index: {}]
  %s1 = inlined_call_operand.vmem [shape: f32[16,128], index: 1, kind: input, shape index: {}]
  %s2 = inlined_call_operand.vmem [shape: f32[1,128], index: 2, kind: input, shape index: {}]
  %s3 = inlined_call_operand.vmem [shape: f32[1,128], index: 3, kind: input, shape index: {}]
  %s4 = inlined_call_operand.vmem [shape: f32[1,128], index: 4, kind: input, shape index: {}]
  %s5 = inlined_call_operand.hbm [shape: f32[128,128], index: 5, kind: input, shape index: {}]
  %s6 = inlined_call_operand.vmem [shape: f32[1,128], index: 6, kind: input, shape index: {}]
  %s7 = inlined_call_operand.vmem [shape: f32[1,128], index: 7, kind: input, shape index: {}]
  %s8 = inlined_call_operand.vmem [shape: f32[1,128], index: 8, kind: input, shape index: {}]
  %s9 = inlined_call_operand.hbm [shape: f32[128,128], index: 9, kind: input, shape index: {}]
  %s10 = inlined_call_operand.vmem [shape: f32[1,128], index: 10, kind: input, shape index: {}]
  %s11 = inlined_call_operand.vmem [shape: f32[1,128], index: 11, kind: input, shape index: {}]
  %s12 = inlined_call_operand.vmem [shape: f32[1,128], index: 12, kind: input, shape index: {}]
  %s13 = inlined_call_operand.hbm [shape: f32[128,256], index: 13, kind: input, shape index: {}]
  %s14 = inlined_call_operand.vmem [shape: f32[1,256], index: 14, kind: input, shape index: {}]
  %s15 = inlined_call_operand.hbm [shape: f32[24,256], index: 15, kind: output, shape index: {}]
  %s16 = sld [smem:[#allocation0]]
  $region105: #{tpu_custom_call.1} parent=0
    _
  %s18 = ssub.s32 1, %s16
  %s19 = scalar_select 0, %s18, %s16
  $region1: #{tpu_custom_call.1} parent=0
    #allocation2 [shape = 'u8[65536]{0}', space=vmem, size = 0x10000, scoped, tag = 'input window, operand 5, single buffered']
    #allocation3 [shape = 's32[2]{0}', space=sflag, size = 0x8, scoped, tag = 'scoped memory for tpu_custom_call.1']
    #allocation4 [shape = 's32[2]{0}', space=sflag, size = 0x8, scoped, tag = 'scoped memory for tpu_custom_call.1']
    #allocation5 [shape = 'u8[65536]{0}', space=vmem, size = 0x10000, scoped, tag = 'input window, operand 9, single buffered']
    #allocation6 [shape = 's32[1]{0}', space=sflag, size = 0x4, scoped, tag = 'scoped memory for tpu_custom_call.1']
    #allocation7 [shape = 'u8[131072]{0}', space=vmem, size = 0x20000, scoped, tag = 'input window, operand 13, single buffered']
    #allocation8 [shape = 'u8[16384]{0}', space=vmem, size = 0x4000, scoped, tag = 'output window, operand 0']
    %20 = vsyncpa [#allocation3], 0
    %21 = vsyncpa [#allocation6], 0
    %22 = vsyncpa [#allocation4], 0
    %s23 = scalar_lea.sflag [#allocation4], 1
    %24 = vsyncpa %s23, 0
    loop: start=0, step=1, limit=5
    $region2: #{tpu_custom_call.1} parent=1 // loop_pre_header
      _
    $region3: #{tpu_custom_call.1} parent=1 // loop_header
      %s26 = sphi 0, %s30
      %p27 = scmp.ge.s32.totalorder %s26, 5
      %s36 = sphi 0, %s38
      %s39 = sphi 0, %s36
      %s40 = sphi 0, %s39
      %s56 = sphi 0, %s40
      %s60 = sphi 0, %s60
      %s62 = sphi 0, %s60
      %s63 = sphi 0, %s62
      %s77 = sphi 0, %s63
      %s81 = sphi 0, %s81
      %s83 = sphi 0, %s81
      %s84 = sphi 0, %s83
      %s98 = sphi 0, %s84
      %s102 = sphi 0, %s102
      %s104 = sphi 0, %s102
      %s105 = sphi 0, %s104
      %s119 = sphi 0, %s105
      %s123 = sphi 0, %s123
      %s125 = sphi 0, %s123
      %s126 = sphi 0, %s125
      %s140 = sphi 0, %s126
      %s144 = sphi 0, %s144
      %s146 = sphi 0, %s144
      %s147 = sphi 0, %s146
      %s161 = sphi 0, %s147
      %s165 = sphi 0, %s165
      %s167 = sphi 0, %s165
      %s168 = sphi 0, %s167
      %s182 = sphi 0, %s168
      %s186 = sphi 0, %s186
      %s188 = sphi 0, %s186
      %s189 = sphi 0, %s188
      %s203 = sphi 0, %s189
      %s207 = sphi 0, %s207
      %s209 = sphi 0, %s207
      %s210 = sphi 0, %s209
      %s224 = sphi 0, %s210
      %s228 = sphi 0, %s228
      %s230 = sphi 0, %s228
      %s231 = sphi 0, %s230
      %s245 = sphi 0, %s231
      %s249 = sphi 0, %s249
      %s251 = sphi 0, %s249
      %s252 = sphi 0, %s251
      %s266 = sphi 0, %s252
      %s270 = sphi 0, %s270
      %s272 = sphi 0, %s270
      %s273 = sphi 0, %s272
      %s287 = sphi 0, %s273
      %s291 = sphi 0, %s291
      %s293 = sphi 0, %s291
      %s294 = sphi 0, %s293
      %s308 = sphi 0, %s294
      %s312 = sphi 0, %s312
      %s314 = sphi 0, %s312
      %s315 = sphi 0, %s314
      %s329 = sphi 0, %s315
      %s333 = sphi 0, %s333
      %s335 = sphi 0, %s333
      %s336 = sphi 0, %s335
      %s350 = sphi 0, %s336
      %s356 = sphi 0, %s358
      %s359 = sphi 0, %s356
      %s360 = sphi 0, %s359
      %s376 = sphi 0, %s360
    $region4: #{tpu_custom_call.1} parent=1 // loop_header_branch
      %29 = sbr.rel (%p27) target = $region8
    $region5: #{tpu_custom_call.1} parent=1 // loop_body
      %s31 = ssub.s32 %s26, 1
      %s32 = ssub.s32 %s26, 2
      %s33 = sadd.s32 %s26, 1
      %s34 = ssub.s32 %s26, %s33
      %p35 = scmp.eq.s32.totalorder %s34, 0
      %s37 = sadd.s32 %s36, 1
      %s38 = scalar_select %p35, %s36, %s37
      %p41 = pneg %p35
      %p42 = scmp.eq.s32.totalorder %s26, 2
      %p43 = por %p41, %p42
      %p44 = scmp.ne.s32.totalorder %s36, %s39
      %p45 = scmp.eq.s32.totalorder %s26, 0
      %p46 = por %p44, %p45
      %p47 = scmp.ne.s32.totalorder %s36, %s39
      %p48 = scmp.eq.s32.totalorder %s31, 2
      %p49 = por %p47, %p48
      %p50 = scmp.ne.s32.totalorder %s39, %s40
      %p51 = scmp.eq.s32.totalorder %s31, 0
      %p52 = por %p50, %p51
      %p53 = scmp.ne.s32.totalorder %s39, %s40
      %p54 = scmp.eq.s32.totalorder %s32, 2
      %p55 = por %p53, %p54
      %p57 = scmp.ne.s32.totalorder %s40, %s56
      %p58 = scmp.eq.s32.totalorder %s32, 0
      %p59 = por %p57, %p58
      %s61 = sadd.s32 %s60, 1
      %p64 = scmp.eq.s32.totalorder %s26, 2
      %p65 = scmp.ne.s32.totalorder %s60, %s62
      %p66 = scmp.eq.s32.totalorder %s26, 0
      %p67 = por %p65, %p66
      %p68 = scmp.ne.s32.totalorder %s60, %s62
      %p69 = scmp.eq.s32.totalorder %s31, 2
      %p70 = por %p68, %p69
      %p71 = scmp.ne.s32.totalorder %s62, %s63
      %p72 = scmp.eq.s32.totalorder %s31, 0
      %p73 = por %p71, %p72
      %p74 = scmp.ne.s32.totalorder %s62, %s63
      %p75 = scmp.eq.s32.totalorder %s32, 2
      %p76 = por %p74, %p75
      %p78 = scmp.ne.s32.totalorder %s63, %s77
      %p79 = scmp.eq.s32.totalorder %s32, 0
      %p80 = por %p78, %p79
      %s82 = sadd.s32 %s81, 1
      %p85 = scmp.eq.s32.totalorder %s26, 2
      %p86 = scmp.ne.s32.totalorder %s81, %s83
      %p87 = scmp.eq.s32.totalorder %s26, 0
      %p88 = por %p86, %p87
      %p89 = scmp.ne.s32.totalorder %s81, %s83
      %p90 = scmp.eq.s32.totalorder %s31, 2
      %p91 = por %p89, %p90
      %p92 = scmp.ne.s32.totalorder %s83, %s84
      %p93 = scmp.eq.s32.totalorder %s31, 0
      %p94 = por %p92, %p93
      %p95 = scmp.ne.s32.totalorder %s83, %s84
      %p96 = scmp.eq.s32.totalorder %s32, 2
      %p97 = por %p95, %p96
      %p99 = scmp.ne.s32.totalorder %s84, %s98
      %p100 = scmp.eq.s32.totalorder %s32, 0
      %p101 = por %p99, %p100
      %s103 = sadd.s32 %s102, 1
      %p106 = scmp.eq.s32.totalorder %s26, 2
      %p107 = scmp.ne.s32.totalorder %s102, %s104
      %p108 = scmp.eq.s32.totalorder %s26, 0
      %p109 = por %p107, %p108
      %p110 = scmp.ne.s32.totalorder %s102, %s104
      %p111 = scmp.eq.s32.totalorder %s31, 2
      %p112 = por %p110, %p111
      %p113 = scmp.ne.s32.totalorder %s104, %s105
      %p114 = scmp.eq.s32.totalorder %s31, 0
      %p115 = por %p113, %p114
      %p116 = scmp.ne.s32.totalorder %s104, %s105
      %p117 = scmp.eq.s32.totalorder %s32, 2
      %p118 = por %p116, %p117
      %p120 = scmp.ne.s32.totalorder %s105, %s119
      %p121 = scmp.eq.s32.totalorder %s32, 0
      %p122 = por %p120, %p121
      %s124 = sadd.s32 %s123, 1
      %p127 = scmp.eq.s32.totalorder %s26, 2
      %p128 = scmp.ne.s32.totalorder %s123, %s125
      %p129 = scmp.eq.s32.totalorder %s26, 0
      %p130 = por %p128, %p129
      %p131 = scmp.ne.s32.totalorder %s123, %s125
      %p132 = scmp.eq.s32.totalorder %s31, 2
      %p133 = por %p131, %p132
      %p134 = scmp.ne.s32.totalorder %s125, %s126
      %p135 = scmp.eq.s32.totalorder %s31, 0
      %p136 = por %p134, %p135
      %p137 = scmp.ne.s32.totalorder %s125, %s126
      %p138 = scmp.eq.s32.totalorder %s32, 2
      %p139 = por %p137, %p138
      %p141 = scmp.ne.s32.totalorder %s126, %s140
      %p142 = scmp.eq.s32.totalorder %s32, 0
      %p143 = por %p141, %p142
      %s145 = sadd.s32 %s144, 1
      %p148 = scmp.eq.s32.totalorder %s26, 2
      %p149 = scmp.ne.s32.totalorder %s144, %s146
      %p150 = scmp.eq.s32.totalorder %s26, 0
      %p151 = por %p149, %p150
      %p152 = scmp.ne.s32.totalorder %s144, %s146
      %p153 = scmp.eq.s32.totalorder %s31, 2
      %p154 = por %p152, %p153
      %p155 = scmp.ne.s32.totalorder %s146, %s147
      %p156 = scmp.eq.s32.totalorder %s31, 0
      %p157 = por %p155, %p156
      %p158 = scmp.ne.s32.totalorder %s146, %s147
      %p159 = scmp.eq.s32.totalorder %s32, 2
      %p160 = por %p158, %p159
      %p162 = scmp.ne.s32.totalorder %s147, %s161
      %p163 = scmp.eq.s32.totalorder %s32, 0
      %p164 = por %p162, %p163
      %s166 = sadd.s32 %s165, 1
      %p169 = scmp.eq.s32.totalorder %s26, 2
      %p170 = scmp.ne.s32.totalorder %s165, %s167
      %p171 = scmp.eq.s32.totalorder %s26, 0
      %p172 = por %p170, %p171
      %p173 = scmp.ne.s32.totalorder %s165, %s167
      %p174 = scmp.eq.s32.totalorder %s31, 2
      %p175 = por %p173, %p174
      %p176 = scmp.ne.s32.totalorder %s167, %s168
      %p177 = scmp.eq.s32.totalorder %s31, 0
      %p178 = por %p176, %p177
      %p179 = scmp.ne.s32.totalorder %s167, %s168
      %p180 = scmp.eq.s32.totalorder %s32, 2
      %p181 = por %p179, %p180
      %p183 = scmp.ne.s32.totalorder %s168, %s182
      %p184 = scmp.eq.s32.totalorder %s32, 0
      %p185 = por %p183, %p184
      %s187 = sadd.s32 %s186, 1
      %p190 = scmp.eq.s32.totalorder %s26, 2
      %p191 = scmp.ne.s32.totalorder %s186, %s188
      %p192 = scmp.eq.s32.totalorder %s26, 0
      %p193 = por %p191, %p192
      %p194 = scmp.ne.s32.totalorder %s186, %s188
      %p195 = scmp.eq.s32.totalorder %s31, 2
      %p196 = por %p194, %p195
      %p197 = scmp.ne.s32.totalorder %s188, %s189
      %p198 = scmp.eq.s32.totalorder %s31, 0
      %p199 = por %p197, %p198
      %p200 = scmp.ne.s32.totalorder %s188, %s189
      %p201 = scmp.eq.s32.totalorder %s32, 2
      %p202 = por %p200, %p201
      %p204 = scmp.ne.s32.totalorder %s189, %s203
      %p205 = scmp.eq.s32.totalorder %s32, 0
      %p206 = por %p204, %p205
      %s208 = sadd.s32 %s207, 1
      %p211 = scmp.eq.s32.totalorder %s26, 2
      %p212 = scmp.ne.s32.totalorder %s207, %s209
      %p213 = scmp.eq.s32.totalorder %s26, 0
      %p214 = por %p212, %p213
      %p215 = scmp.ne.s32.totalorder %s207, %s209
      %p216 = scmp.eq.s32.totalorder %s31, 2
      %p217 = por %p215, %p216
      %p218 = scmp.ne.s32.totalorder %s209, %s210
      %p219 = scmp.eq.s32.totalorder %s31, 0
      %p220 = por %p218, %p219
      %p221 = scmp.ne.s32.totalorder %s209, %s210
      %p222 = scmp.eq.s32.totalorder %s32, 2
      %p223 = por %p221, %p222
      %p225 = scmp.ne.s32.totalorder %s210, %s224
      %p226 = scmp.eq.s32.totalorder %s32, 0
      %p227 = por %p225, %p226
      %s229 = sadd.s32 %s228, 1
      %p232 = scmp.eq.s32.totalorder %s26, 2
      %p233 = scmp.ne.s32.totalorder %s228, %s230
      %p234 = scmp.eq.s32.totalorder %s26, 0
      %p235 = por %p233, %p234
      %p236 = scmp.ne.s32.totalorder %s228, %s230
      %p237 = scmp.eq.s32.totalorder %s31, 2
      %p238 = por %p236, %p237
      %p239 = scmp.ne.s32.totalorder %s230, %s231
      %p240 = scmp.eq.s32.totalorder %s31, 0
      %p241 = por %p239, %p240
      %p242 = scmp.ne.s32.totalorder %s230, %s231
      %p243 = scmp.eq.s32.totalorder %s32, 2
      %p244 = por %p242, %p243
      %p246 = scmp.ne.s32.totalorder %s231, %s245
      %p247 = scmp.eq.s32.totalorder %s32, 0
      %p248 = por %p246, %p247
      %s250 = sadd.s32 %s249, 1
      %p253 = scmp.eq.s32.totalorder %s26, 2
      %p254 = scmp.ne.s32.totalorder %s249, %s251
      %p255 = scmp.eq.s32.totalorder %s26, 0
      %p256 = por %p254, %p255
      %p257 = scmp.ne.s32.totalorder %s249, %s251
      %p258 = scmp.eq.s32.totalorder %s31, 2
      %p259 = por %p257, %p258
      %p260 = scmp.ne.s32.totalorder %s251, %s252
      %p261 = scmp.eq.s32.totalorder %s31, 0
      %p262 = por %p260, %p261
      %p263 = scmp.ne.s32.totalorder %s251, %s252
      %p264 = scmp.eq.s32.totalorder %s32, 2
      %p265 = por %p263, %p264
      %p267 = scmp.ne.s32.totalorder %s252, %s266
      %p268 = scmp.eq.s32.totalorder %s32, 0
      %p269 = por %p267, %p268
      %s271 = sadd.s32 %s270, 1
      %p274 = scmp.eq.s32.totalorder %s26, 2
      %p275 = scmp.ne.s32.totalorder %s270, %s272
      %p276 = scmp.eq.s32.totalorder %s26, 0
      %p277 = por %p275, %p276
      %p278 = scmp.ne.s32.totalorder %s270, %s272
      %p279 = scmp.eq.s32.totalorder %s31, 2
      %p280 = por %p278, %p279
      %p281 = scmp.ne.s32.totalorder %s272, %s273
      %p282 = scmp.eq.s32.totalorder %s31, 0
      %p283 = por %p281, %p282
      %p284 = scmp.ne.s32.totalorder %s272, %s273
      %p285 = scmp.eq.s32.totalorder %s32, 2
      %p286 = por %p284, %p285
      %p288 = scmp.ne.s32.totalorder %s273, %s287
      %p289 = scmp.eq.s32.totalorder %s32, 0
      %p290 = por %p288, %p289
      %s292 = sadd.s32 %s291, 1
      %p295 = scmp.eq.s32.totalorder %s26, 2
      %p296 = scmp.ne.s32.totalorder %s291, %s293
      %p297 = scmp.eq.s32.totalorder %s26, 0
      %p298 = por %p296, %p297
      %p299 = scmp.ne.s32.totalorder %s291, %s293
      %p300 = scmp.eq.s32.totalorder %s31, 2
      %p301 = por %p299, %p300
      %p302 = scmp.ne.s32.totalorder %s293, %s294
      %p303 = scmp.eq.s32.totalorder %s31, 0
      %p304 = por %p302, %p303
      %p305 = scmp.ne.s32.totalorder %s293, %s294
      %p306 = scmp.eq.s32.totalorder %s32, 2
      %p307 = por %p305, %p306
      %p309 = scmp.ne.s32.totalorder %s294, %s308
      %p310 = scmp.eq.s32.totalorder %s32, 0
      %p311 = por %p309, %p310
      %s313 = sadd.s32 %s312, 1
      %p316 = scmp.eq.s32.totalorder %s26, 2
      %p317 = scmp.ne.s32.totalorder %s312, %s314
      %p318 = scmp.eq.s32.totalorder %s26, 0
      %p319 = por %p317, %p318
      %p320 = scmp.ne.s32.totalorder %s312, %s314
      %p321 = scmp.eq.s32.totalorder %s31, 2
      %p322 = por %p320, %p321
      %p323 = scmp.ne.s32.totalorder %s314, %s315
      %p324 = scmp.eq.s32.totalorder %s31, 0
      %p325 = por %p323, %p324
      %p326 = scmp.ne.s32.totalorder %s314, %s315
      %p327 = scmp.eq.s32.totalorder %s32, 2
      %p328 = por %p326, %p327
      %p330 = scmp.ne.s32.totalorder %s315, %s329
      %p331 = scmp.eq.s32.totalorder %s32, 0
      %p332 = por %p330, %p331
      %s334 = sadd.s32 %s333, 1
      %p337 = scmp.eq.s32.totalorder %s26, 2
      %p338 = scmp.ne.s32.totalorder %s333, %s335
      %p339 = scmp.eq.s32.totalorder %s26, 0
      %p340 = por %p338, %p339
      %p341 = scmp.ne.s32.totalorder %s333, %s335
      %p342 = scmp.eq.s32.totalorder %s31, 2
      %p343 = por %p341, %p342
      %p344 = scmp.ne.s32.totalorder %s335, %s336
      %p345 = scmp.eq.s32.totalorder %s31, 0
      %p346 = por %p344, %p345
      %p347 = scmp.ne.s32.totalorder %s335, %s336
      %p348 = scmp.eq.s32.totalorder %s32, 2
      %p349 = por %p347, %p348
      %p351 = scmp.ne.s32.totalorder %s336, %s350
      %p352 = scmp.eq.s32.totalorder %s32, 0
      %p353 = por %p351, %p352
      %s354 = ssub.s32 %s26, %s33
      %p355 = scmp.eq.s32.totalorder %s354, 0
      %s357 = sadd.s32 %s356, 1
      %s358 = scalar_select %p355, %s356, %s357
      %p361 = pneg %p355
      %p362 = scmp.eq.s32.totalorder %s26, 2
      %p363 = por %p361, %p362
      %p364 = scmp.ne.s32.totalorder %s356, %s359
      %p365 = scmp.eq.s32.totalorder %s26, 0
      %p366 = por %p364, %p365
      %p367 = scmp.ne.s32.totalorder %s356, %s359
      %p368 = scmp.eq.s32.totalorder %s31, 2
      %p369 = por %p367, %p368
      %p370 = scmp.ne.s32.totalorder %s359, %s360
      %p371 = scmp.eq.s32.totalorder %s31, 0
      %p372 = por %p370, %p371
      %p373 = scmp.ne.s32.totalorder %s359, %s360
      %p374 = scmp.eq.s32.totalorder %s32, 2
      %p375 = por %p373, %p374
      %p377 = scmp.ne.s32.totalorder %s360, %s376
      %p378 = scmp.eq.s32.totalorder %s32, 0
      %p379 = por %p377, %p378
      %p380 = scmp.le.s32.totalorder 1, %s26
      %p381 = scmp.lt.s32.totalorder %s26, 4
      %p382 = pnand %p380, %p381
      %p383 = pneg %p382
      // Predicated region
      $region9: #{tpu_custom_call.1} parent=5 // pred_check
        _
      $region10: #{tpu_custom_call.1} parent=5 // pred_check_branch
        %385 = sbr.rel (%p382) target = $region12
      $region11: #{tpu_custom_call.1} parent=5 // pred_region
        %s386 = ssub.s32 %s26, 1
        // Predicated region
        $region13: #{tpu_custom_call.1} parent=11 // pred_check
          %p387 = pneg %p73
        $region14: #{tpu_custom_call.1} parent=11 // pred_check_branch
          %389 = sbr.rel (%p387) target = $region16
        $region15: #{tpu_custom_call.1} parent=11 // pred_region
          _
        $region16: #{tpu_custom_call.1} parent=11 // pred_fallthru
          _
        // Predicated region
        $region17: #{tpu_custom_call.1} parent=11 // pred_check
          %p390 = pneg %p94
        $region18: #{tpu_custom_call.1} parent=11 // pred_check_branch
          %392 = sbr.rel (%p390) target = $region20
        $region19: #{tpu_custom_call.1} parent=11 // pred_region
          _
        $region20: #{tpu_custom_call.1} parent=11 // pred_fallthru
          _
        // Predicated region
        $region21: #{tpu_custom_call.1} parent=11 // pred_check
          %p393 = pneg %p115
        $region22: #{tpu_custom_call.1} parent=11 // pred_check_branch
          %395 = sbr.rel (%p393) target = $region24
        $region23: #{tpu_custom_call.1} parent=11 // pred_region
          _
        $region24: #{tpu_custom_call.1} parent=11 // pred_fallthru
          _
        // Predicated region
        $region25: #{tpu_custom_call.1} parent=11 // pred_check
          %p396 = pneg %p136
        $region26: #{tpu_custom_call.1} parent=11 // pred_check_branch
          %398 = sbr.rel (%p396) target = $region28
        $region27: #{tpu_custom_call.1} parent=11 // pred_region
          _
        $region28: #{tpu_custom_call.1} parent=11 // pred_fallthru
          _
        // Predicated region
        $region29: #{tpu_custom_call.1} parent=11 // pred_check
          %p399 = pneg %p157
        $region30: #{tpu_custom_call.1} parent=11 // pred_check_branch
          %401 = sbr.rel (%p399) target = $region32
        $region31: #{tpu_custom_call.1} parent=11 // pred_region
          %s403 = ssub.s32 2048, 2048
          %404 = vsyncadd [#allocation3], %s403
          %s405 = sshll.u32 [#allocation2], 4
          %s406 = int_to_ptr.vmem [resolvable:$true] %s405
          %411 = dma.hbm_to_vmem [thread:$0]  %s5, 2048, %s406, [#allocation3], 128, 128, 8
        $region32: #{tpu_custom_call.1} parent=11 // pred_fallthru
          _
        // Predicated region
        $region33: #{tpu_custom_call.1} parent=11 // pred_check
          %p412 = pneg %p178
        $region34: #{tpu_custom_call.1} parent=11 // pred_check_branch
          %414 = sbr.rel (%p412) target = $region36
        $region35: #{tpu_custom_call.1} parent=11 // pred_region
          _
        $region36: #{tpu_custom_call.1} parent=11 // pred_fallthru
          _
        // Predicated region
        $region37: #{tpu_custom_call.1} parent=11 // pred_check
          %p415 = pneg %p199
        $region38: #{tpu_custom_call.1} parent=11 // pred_check_branch
          %417 = sbr.rel (%p415) target = $region40
        $region39: #{tpu_custom_call.1} parent=11 // pred_region
          _
        $region40: #{tpu_custom_call.1} parent=11 // pred_fallthru
          _
        // Predicated region
        $region41: #{tpu_custom_call.1} parent=11 // pred_check
          %p418 = pneg %p220
        $region42: #{tpu_custom_call.1} parent=11 // pred_check_branch
          %420 = sbr.rel (%p418) target = $region44
        $region43: #{tpu_custom_call.1} parent=11 // pred_region
          _
        $region44: #{tpu_custom_call.1} parent=11 // pred_fallthru
          _
        // Predicated region
        $region45: #{tpu_custom_call.1} parent=11 // pred_check
          %p421 = pneg %p241
        $region46: #{tpu_custom_call.1} parent=11 // pred_check_branch
          %423 = sbr.rel (%p421) target = $region48
        $region47: #{tpu_custom_call.1} parent=11 // pred_region
          %s425 = ssub.s32 2048, 2048
          %426 = vsyncadd [#allocation6], %s425
          %s427 = sshll.u32 [#allocation5], 4
          %s428 = int_to_ptr.vmem [resolvable:$true] %s427
          %433 = dma.hbm_to_vmem [thread:$0]  %s9, 2048, %s428, [#allocation6], 128, 128, 8
        $region48: #{tpu_custom_call.1} parent=11 // pred_fallthru
          _
        // Predicated region
        $region49: #{tpu_custom_call.1} parent=11 // pred_check
          %p434 = pneg %p262
        $region50: #{tpu_custom_call.1} parent=11 // pred_check_branch
          %436 = sbr.rel (%p434) target = $region52
        $region51: #{tpu_custom_call.1} parent=11 // pred_region
          _
        $region52: #{tpu_custom_call.1} parent=11 // pred_fallthru
          _
        // Predicated region
        $region53: #{tpu_custom_call.1} parent=11 // pred_check
          %p437 = pneg %p283
        $region54: #{tpu_custom_call.1} parent=11 // pred_check_branch
          %439 = sbr.rel (%p437) target = $region56
        $region55: #{tpu_custom_call.1} parent=11 // pred_region
          _
        $region56: #{tpu_custom_call.1} parent=11 // pred_fallthru
          _
        // Predicated region
        $region57: #{tpu_custom_call.1} parent=11 // pred_check
          %p440 = pneg %p304
        $region58: #{tpu_custom_call.1} parent=11 // pred_check_branch
          %442 = sbr.rel (%p440) target = $region60
        $region59: #{tpu_custom_call.1} parent=11 // pred_region
          _
        $region60: #{tpu_custom_call.1} parent=11 // pred_fallthru
          _
        // Predicated region
        $region61: #{tpu_custom_call.1} parent=11 // pred_check
          %p443 = pneg %p325
        $region62: #{tpu_custom_call.1} parent=11 // pred_check_branch
          %445 = sbr.rel (%p443) target = $region64
        $region63: #{tpu_custom_call.1} parent=11 // pred_region
          %s447 = ssub.s32 4096, 4096
          %448 = vsyncadd [#allocation6], %s447
          %s449 = sshll.u32 [#allocation7], 4
          %s450 = int_to_ptr.vmem [resolvable:$true] %s449
          %455 = dma.hbm_to_vmem [thread:$0]  %s13, 4096, %s450, [#allocation6], 256, 256, 16
        $region64: #{tpu_custom_call.1} parent=11 // pred_fallthru
          _
        // Predicated region
        $region65: #{tpu_custom_call.1} parent=11 // pred_check
          %p456 = pneg %p346
        $region66: #{tpu_custom_call.1} parent=11 // pred_check_branch
          %458 = sbr.rel (%p456) target = $region68
        $region67: #{tpu_custom_call.1} parent=11 // pred_region
          _
        $region68: #{tpu_custom_call.1} parent=11 // pred_fallthru
          _
      $region12: #{tpu_custom_call.1} parent=5 // pred_fallthru
        _
      %p459 = scmp.lt.s32.totalorder %s26, 3
      // Predicated region
      $region69: #{tpu_custom_call.1} parent=5 // pred_check
        %p460 = pneg %p459
      $region70: #{tpu_custom_call.1} parent=5 // pred_check_branch
        %462 = sbr.rel (%p460) target = $region72
      $region71: #{tpu_custom_call.1} parent=5 // pred_region
        // Predicated region
        $region73: #{tpu_custom_call.1} parent=71 // pred_check
          %p463 = pneg %p46
        $region74: #{tpu_custom_call.1} parent=71 // pred_check_branch
          %465 = sbr.rel (%p463) target = $region76
        $region75: #{tpu_custom_call.1} parent=71 // pred_region
          %p466 = scmp.lt.s32.totalorder %s26, 2
          %s467 = scalar_select %p466, %s26, 2
          %s468 = smul.addr %s467, 8
          %s469 = scalar_lea.vmem %s0, %s468
        $region76: #{tpu_custom_call.1} parent=71 // pred_fallthru
          _
      $region72: #{tpu_custom_call.1} parent=5 // pred_fallthru
        _
      %p470 = scmp.le.s32.totalorder 1, %s26
      %p471 = scmp.lt.s32.totalorder %s26, 4
      %p472 = pnand %p470, %p471
      %p473 = pneg %p472
      // Predicated region
      $region77: #{tpu_custom_call.1} parent=5 // pred_check
        _
      $region78: #{tpu_custom_call.1} parent=5 // pred_check_branch
        %475 = sbr.rel (%p472) target = $region80
      $region79: #{tpu_custom_call.1} parent=5 // pred_region
        %s476 = ssub.s32 %s26, 1
        // Predicated region
        $region81: #{tpu_custom_call.1} parent=79 // pred_check
          %p477 = pneg %p157
        $region82: #{tpu_custom_call.1} parent=79 // pred_check_branch
          %479 = sbr.rel (%p477) target = $region84
        $region83: #{tpu_custom_call.1} parent=79 // pred_region
          %480 = dma.done [#allocation3], 2048
        $region84: #{tpu_custom_call.1} parent=79 // pred_fallthru
          _
        // Predicated region
        $region85: #{tpu_custom_call.1} parent=79 // pred_check
          %p481 = pneg %p241
        $region86: #{tpu_custom_call.1} parent=79 // pred_check_branch
          %483 = sbr.rel (%p481) target = $region88
        $region87: #{tpu_custom_call.1} parent=79 // pred_region
          %484 = dma.done [#allocation6], 2048
        $region88: #{tpu_custom_call.1} parent=79 // pred_fallthru
          _
        // Predicated region
        $region89: #{tpu_custom_call.1} parent=79 // pred_check
          %p485 = pneg %p325
        $region90: #{tpu_custom_call.1} parent=79 // pred_check_branch
          %487 = sbr.rel (%p485) target = $region92
        $region91: #{tpu_custom_call.1} parent=79 // pred_region
          %488 = dma.done [#allocation6], 4096
        $region92: #{tpu_custom_call.1} parent=79 // pred_fallthru
          _
        %p489 = scmp.lt.s32.totalorder %s31, 2
        %s490 = scalar_select %p489, %s31, 2
        %s491 = smul.addr %s490, 8
        %s492 = scalar_lea.vmem %s0, %s491
        %p493 = pneg %p52
        %p494 = pneg %p49
        %p495 = pneg %p73
        %p496 = pneg %p70
        %p497 = pneg %p94
        %p498 = pneg %p91
        %p499 = pneg %p115
        %p500 = pneg %p112
        %p501 = pneg %p136
        %p502 = pneg %p133
        %p503 = pneg %p157
        %p504 = pneg %p154
        %p505 = pneg %p178
        %p506 = pneg %p175
        %p507 = pneg %p199
        %p508 = pneg %p196
        %p509 = pneg %p220
        %p510 = pneg %p217
        %p511 = pneg %p241
        %p512 = pneg %p238
        %p513 = pneg %p262
        %p514 = pneg %p259
        %p515 = pneg %p283
        %p516 = pneg %p280
        %p517 = pneg %p304
        %p518 = pneg %p301
        %p519 = pneg %p325
        %p520 = pneg %p322
        %p521 = pneg %p346
        %p522 = pneg %p343
        %p523 = pneg %p372
        %p524 = pneg %p369
        %s525 = sand.u32 %s359, 1
        %s526 = scalar_lea.sflag [#allocation4], %s525
        %s527 = sand.u32 %s359, 1
        %s528 = smul.addr %s527, 16
        %s529 = scalar_lea.vmem [#allocation8], %s528
        %p530 = scmp.lt.s32.totalorder %s31, 2
        %s531 = scalar_select %p530, %s31, 2
        %s532 = smul.addr %s531, 8
        %s533 = scalar_lea.vmem %s0, %s532
        %v534 = vld [vmem:[%s533] sm:$0xff]
        %v535 = vld [vmem:[%s1] sm:$0xff]
        %v536 = vld [vmem:[%s1 + $0x8] sm:$0xff]
        %v537 = vld [vmem:[%s2] sm:$0x1]
        %v539 = vlaneseq
        %v540 = vshrl.u32 %v539, 7
        %v541 = vsub.s32 0, %v540
        %v542 = vrot.slane %v537, %v541
        %vm544 = vcmask 130048
        %v546 = vsel %vm544, %v534, 0
        %548 = vmatprep.subr.mxu0 0.0
        %549 = vmatpush1.msra.mxu0 %v535
        %550 = vmatprep.subr.mxu0 0.0
        %551 = vmatpush1.msra.mxu0 %v536
        %552 = vmatprep.subr.mxu0 0.0
        %553 = vmatpush1.msra.mxu0 0.0
        %554 = vmatprep.subr.mxu0 0.0
        %555 = vmatpush1.msra.mxu0 0.0
        %556 = vmatprep.subr.mxu0 0.0
        %557 = vmatpush1.msra.mxu0 0.0
        %558 = vmatprep.subr.mxu0 0.0
        %559 = vmatpush1.msra.mxu0 0.0
        %560 = vmatprep.subr.mxu0 0.0
        %561 = vmatpush1.msra.mxu0 0.0
        %562 = vmatprep.subr.mxu0 0.0
        %563 = vmatpush1.msra.mxu0 0.0
        %564 = vmatprep.subr.mxu0 0.0
        %565 = vmatpush1.msra.mxu0 0.0
        %566 = vmatprep.subr.mxu0 0.0
        %567 = vmatpush1.msra.mxu0 0.0
        %568 = vmatprep.subr.mxu0 0.0
        %569 = vmatpush1.msra.mxu0 0.0
        %570 = vmatprep.subr.mxu0 0.0
        %571 = vmatpush1.msra.mxu0 0.0
        %572 = vmatprep.subr.mxu0 0.0
        %573 = vmatpush1.msra.mxu0 0.0
        %574 = vmatprep.subr.mxu0 0.0
        %575 = vmatpush1.msra.mxu0 0.0
        %576 = vmatprep.subr.mxu0 0.0
        %577 = vmatpush1.msra.mxu0 0.0
        %578 = vmatprep.subr.mxu0 0.0
        %579 = vmatpush1.msra.mxu0 0.0
        %580 = vmatprep.subr.mxu0 0.0
        %581 = vmatpush1.msra.mxu0 0.0
        %582 = vmatprep.subr.mxu0 0.0
        %583 = vmatpush1.msra.mxu0 0.0
        %584 = vmatprep.subr.mxu0 0.0
        %585 = vmatpush1.msra.mxu0 0.0
        %586 = vmatprep.subr.mxu0 0.0
        %587 = vmatpush1.msra.mxu0 0.0
        %588 = vmatprep.subr.mxu0 0.0
        %589 = vmatpush1.msra.mxu0 0.0
        %590 = vmatprep.subr.mxu0 0.0
        %591 = vmatpush1.msra.mxu0 0.0
        %592 = vmatprep.subr.mxu0 0.0
        %593 = vmatpush1.msra.mxu0 0.0
        %594 = vmatprep.subr.mxu0 0.0
        %595 = vmatpush1.msra.mxu0 0.0
        %596 = vmatprep.subr.mxu0 0.0
        %597 = vmatpush1.msra.mxu0 0.0
        %598 = vmatprep.subr.mxu0 0.0
        %599 = vmatpush1.msra.mxu0 0.0
        %600 = vmatprep.subr.mxu0 0.0
        %601 = vmatpush1.msra.mxu0 0.0
        %602 = vmatprep.subr.mxu0 0.0
        %603 = vmatpush1.msra.mxu0 0.0
        %604 = vmatprep.subr.mxu0 0.0
        %605 = vmatpush1.msra.mxu0 0.0
        %606 = vmatprep.subr.mxu0 0.0
        %607 = vmatpush1.msra.mxu0 0.0
        %608 = vmatprep.subr.mxu0 0.0
        %609 = vmatpush1.msra.mxu0 0.0
        %610 = vmatprep.subr.mxu0 0.0
        %611 = vmatpush1.msra.mxu0 0.0
        %612 = vmatprep.mubr.f32.mxu0 0.0
        %613 = vmatmul.mubr.f32.gmra.mrb[0].mxu0 %v546
        %v614 = vpop.f32.mrb[0].mxu0
        %v615 = vadd.f32 %v542, %v614
        %v616 = vpop.f32.mrb[0].mxu0
        %617 = vdwg.mxu0
        %v618 = vld [vmem:[%s3] sm:$0x1]
        %v619 = vld [vmem:[%s4] sm:$0x1]
        %620 = vadd.xlane.f32.xlu0 %v615
        %v621 = vpop.xlane.xlu0 %620
        %v622 = vmul.f32 %v621, 0.015625
        %v623 = vsub.f32 %v615, %v622
        %v624 = vlaneseq
        %v625 = vand.u32 %v624, 127
        %vm626 = vcmp.lt.s32.totalorder %v625, 64
        %v627 = vsel %vm626, 1, 0
        %vm628 = vcmp.eq.s32.totalorder %v627, 1
        %v629 = vsel %vm628, %v623, 0.0
        %v630 = vmul.f32 %v629, %v629
        %631 = vadd.xlane.f32.xlu0 %v630
        %v632 = vpop.xlane.xlu0 %631
        %v633 = vmul.f32 %v632, 0.015625
        %v634 = vadd.f32 %v633, 1e-05
        %v635 = vrsqrt.pop %v634
        %v636 = vmul.f32 %v629, %v635
        %v638 = vlaneseq
        %v639 = vshrl.u32 %v638, 7
        %v640 = vsub.s32 0, %v639
        %v641 = vrot.slane %v618, %v640
        %v643 = vmul.f32 %v636, %v641
        %v645 = vlaneseq
        %v646 = vshrl.u32 %v645, 7
        %v647 = vsub.s32 0, %v646
        %v648 = vrot.slane %v619, %v647
        %v650 = vadd.f32 %v643, %v648
        %v651 = vmax.f32 %v650, 0.0
        %v652 = vld [vmem:[#allocation2] sm:$0xff]
        %v653 = vld [vmem:[#allocation2 + $0x8] sm:$0xff]
        %v654 = vld [vmem:[#allocation2 + $0x10] sm:$0xff]
        %v655 = vld [vmem:[#allocation2 + $0x18] sm:$0xff]
        %v656 = vld [vmem:[#allocation2 + $0x20] sm:$0xff]
        %v657 = vld [vmem:[#allocation2 + $0x28] sm:$0xff]
        %v658 = vld [vmem:[#allocation2 + $0x30] sm:$0xff]
        %v659 = vld [vmem:[#allocation2 + $0x38] sm:$0xff]
        %v660 = vld [vmem:[#allocation2 + $0x40] sm:$0xff]
        %v661 = vld [vmem:[#allocation2 + $0x48] sm:$0xff]
        %v662 = vld [vmem:[#allocation2 + $0x50] sm:$0xff]
        %v663 = vld [vmem:[#allocation2 + $0x58] sm:$0xff]
        %v664 = vld [vmem:[#allocation2 + $0x60] sm:$0xff]
        %v665 = vld [vmem:[#allocation2 + $0x68] sm:$0xff]
        %v666 = vld [vmem:[#allocation2 + $0x70] sm:$0xff]
        %v667 = vld [vmem:[#allocation2 + $0x78] sm:$0xff]
        %v668 = vld [vmem:[%s6] sm:$0x1]
        %v670 = vlaneseq
        %v671 = vshrl.u32 %v670, 7
        %v672 = vsub.s32 0, %v671
        %v673 = vrot.slane %v668, %v672
        %675 = vmatprep.subr.mxu0 0.0
        %676 = vmatpush1.msra.mxu0 %v652
        %677 = vmatprep.subr.mxu0 0.0
        %678 = vmatpush1.msra.mxu0 %v653
        %679 = vmatprep.subr.mxu0 0.0
        %680 = vmatpush1.msra.mxu0 %v654
        %681 = vmatprep.subr.mxu0 0.0
        %682 = vmatpush1.msra.mxu0 %v655
        %683 = vmatprep.subr.mxu0 0.0
        %684 = vmatpush1.msra.mxu0 %v656
        %685 = vmatprep.subr.mxu0 0.0
        %686 = vmatpush1.msra.mxu0 %v657
        %687 = vmatprep.subr.mxu0 0.0
        %688 = vmatpush1.msra.mxu0 %v658
        %689 = vmatprep.subr.mxu0 0.0
        %690 = vmatpush1.msra.mxu0 %v659
        %691 = vmatprep.subr.mxu0 0.0
        %692 = vmatpush1.msra.mxu0 %v660
        %693 = vmatprep.subr.mxu0 0.0
        %694 = vmatpush1.msra.mxu0 %v661
        %695 = vmatprep.subr.mxu0 0.0
        %696 = vmatpush1.msra.mxu0 %v662
        %697 = vmatprep.subr.mxu0 0.0
        %698 = vmatpush1.msra.mxu0 %v663
        %699 = vmatprep.subr.mxu0 0.0
        %700 = vmatpush1.msra.mxu0 %v664
        %701 = vmatprep.subr.mxu0 0.0
        %702 = vmatpush1.msra.mxu0 %v665
        %703 = vmatprep.subr.mxu0 0.0
        %704 = vmatpush1.msra.mxu0 %v666
        %705 = vmatprep.subr.mxu0 0.0
        %706 = vmatpush1.msra.mxu0 %v667
        %707 = vmatprep.subr.mxu0 0.0
        %708 = vmatpush1.msra.mxu0 0.0
        %709 = vmatprep.subr.mxu0 0.0
        %710 = vmatpush1.msra.mxu0 0.0
        %711 = vmatprep.subr.mxu0 0.0
        %712 = vmatpush1.msra.mxu0 0.0
        %713 = vmatprep.subr.mxu0 0.0
        %714 = vmatpush1.msra.mxu0 0.0
        %715 = vmatprep.subr.mxu0 0.0
        %716 = vmatpush1.msra.mxu0 0.0
        %717 = vmatprep.subr.mxu0 0.0
        %718 = vmatpush1.msra.mxu0 0.0
        %719 = vmatprep.subr.mxu0 0.0
        %720 = vmatpush1.msra.mxu0 0.0
        %721 = vmatprep.subr.mxu0 0.0
        %722 = vmatpush1.msra.mxu0 0.0
        %723 = vmatprep.subr.mxu0 0.0
        %724 = vmatpush1.msra.mxu0 0.0
        %725 = vmatprep.subr.mxu0 0.0
        %726 = vmatpush1.msra.mxu0 0.0
        %727 = vmatprep.subr.mxu0 0.0
        %728 = vmatpush1.msra.mxu0 0.0
        %729 = vmatprep.subr.mxu0 0.0
        %730 = vmatpush1.msra.mxu0 0.0
        %731 = vmatprep.subr.mxu0 0.0
        %732 = vmatpush1.msra.mxu0 0.0
        %733 = vmatprep.subr.mxu0 0.0
        %734 = vmatpush1.msra.mxu0 0.0
        %735 = vmatprep.subr.mxu0 0.0
        %736 = vmatpush1.msra.mxu0 0.0
        %737 = vmatprep.subr.mxu0 0.0
        %738 = vmatpush1.msra.mxu0 0.0
        %739 = vmatprep.mubr.f32.mxu0 0.0
        %740 = vmatmul.mubr.f32.gmra.mrb[0].mxu0 %v651
        %v741 = vpop.f32.mrb[0].mxu0
        %v742 = vadd.f32 %v673, %v741
        %v743 = vpop.f32.mrb[0].mxu0
        %744 = vdwg.mxu0
        %v745 = vld [vmem:[%s7] sm:$0x1]
        %v746 = vld [vmem:[%s8] sm:$0x1]
        %747 = vadd.xlane.f32.xlu0 %v742
        %v748 = vpop.xlane.xlu0 %747
        %v749 = vmul.f32 %v748, 0.015625
        %v750 = vsub.f32 %v742, %v749
        %v751 = vsel %vm628, %v750, 0.0
        %v752 = vmul.f32 %v751, %v751
        %753 = vadd.xlane.f32.xlu0 %v752
        %v754 = vpop.xlane.xlu0 %753
        %v755 = vmul.f32 %v754, 0.015625
        %v756 = vadd.f32 %v755, 1e-05
        %v757 = vrsqrt.pop %v756
        %v758 = vmul.f32 %v751, %v757
        %v760 = vlaneseq
        %v761 = vshrl.u32 %v760, 7
        %v762 = vsub.s32 0, %v761
        %v763 = vrot.slane %v745, %v762
        %v765 = vmul.f32 %v758, %v763
        %v767 = vlaneseq
        %v768 = vshrl.u32 %v767, 7
        %v769 = vsub.s32 0, %v768
        %v770 = vrot.slane %v746, %v769
        %v772 = vadd.f32 %v765, %v770
        %v773 = vmax.f32 %v772, 0.0
        %v774 = vld [vmem:[#allocation5] sm:$0xff]
        %v775 = vld [vmem:[#allocation5 + $0x8] sm:$0xff]
        %v776 = vld [vmem:[#allocation5 + $0x10] sm:$0xff]
        %v777 = vld [vmem:[#allocation5 + $0x18] sm:$0xff]
        %v778 = vld [vmem:[#allocation5 + $0x20] sm:$0xff]
        %v779 = vld [vmem:[#allocation5 + $0x28] sm:$0xff]
        %v780 = vld [vmem:[#allocation5 + $0x30] sm:$0xff]
        %v781 = vld [vmem:[#allocation5 + $0x38] sm:$0xff]
        %v782 = vld [vmem:[#allocation5 + $0x40] sm:$0xff]
        %v783 = vld [vmem:[#allocation5 + $0x48] sm:$0xff]
        %v784 = vld [vmem:[#allocation5 + $0x50] sm:$0xff]
        %v785 = vld [vmem:[#allocation5 + $0x58] sm:$0xff]
        %v786 = vld [vmem:[#allocation5 + $0x60] sm:$0xff]
        %v787 = vld [vmem:[#allocation5 + $0x68] sm:$0xff]
        %v788 = vld [vmem:[#allocation5 + $0x70] sm:$0xff]
        %v789 = vld [vmem:[#allocation5 + $0x78] sm:$0xff]
        %v790 = vld [vmem:[%s10] sm:$0x1]
        %v792 = vlaneseq
        %v793 = vshrl.u32 %v792, 7
        %v794 = vsub.s32 0, %v793
        %v795 = vrot.slane %v790, %v794
        %797 = vmatprep.subr.mxu0 0.0
        %798 = vmatpush1.msra.mxu0 %v774
        %799 = vmatprep.subr.mxu0 0.0
        %800 = vmatpush1.msra.mxu0 %v775
        %801 = vmatprep.subr.mxu0 0.0
        %802 = vmatpush1.msra.mxu0 %v776
        %803 = vmatprep.subr.mxu0 0.0
        %804 = vmatpush1.msra.mxu0 %v777
        %805 = vmatprep.subr.mxu0 0.0
        %806 = vmatpush1.msra.mxu0 %v778
        %807 = vmatprep.subr.mxu0 0.0
        %808 = vmatpush1.msra.mxu0 %v779
        %809 = vmatprep.subr.mxu0 0.0
        %810 = vmatpush1.msra.mxu0 %v780
        %811 = vmatprep.subr.mxu0 0.0
        %812 = vmatpush1.msra.mxu0 %v781
        %813 = vmatprep.subr.mxu0 0.0
        %814 = vmatpush1.msra.mxu0 %v782
        %815 = vmatprep.subr.mxu0 0.0
        %816 = vmatpush1.msra.mxu0 %v783
        %817 = vmatprep.subr.mxu0 0.0
        %818 = vmatpush1.msra.mxu0 %v784
        %819 = vmatprep.subr.mxu0 0.0
        %820 = vmatpush1.msra.mxu0 %v785
        %821 = vmatprep.subr.mxu0 0.0
        %822 = vmatpush1.msra.mxu0 %v786
        %823 = vmatprep.subr.mxu0 0.0
        %824 = vmatpush1.msra.mxu0 %v787
        %825 = vmatprep.subr.mxu0 0.0
        %826 = vmatpush1.msra.mxu0 %v788
        %827 = vmatprep.subr.mxu0 0.0
        %828 = vmatpush1.msra.mxu0 %v789
        %829 = vmatprep.subr.mxu0 0.0
        %830 = vmatpush1.msra.mxu0 0.0
        %831 = vmatprep.subr.mxu0 0.0
        %832 = vmatpush1.msra.mxu0 0.0
        %833 = vmatprep.subr.mxu0 0.0
        %834 = vmatpush1.msra.mxu0 0.0
        %835 = vmatprep.subr.mxu0 0.0
        %836 = vmatpush1.msra.mxu0 0.0
        %837 = vmatprep.subr.mxu0 0.0
        %838 = vmatpush1.msra.mxu0 0.0
        %839 = vmatprep.subr.mxu0 0.0
        %840 = vmatpush1.msra.mxu0 0.0
        %841 = vmatprep.subr.mxu0 0.0
        %842 = vmatpush1.msra.mxu0 0.0
        %843 = vmatprep.subr.mxu0 0.0
        %844 = vmatpush1.msra.mxu0 0.0
        %845 = vmatprep.subr.mxu0 0.0
        %846 = vmatpush1.msra.mxu0 0.0
        %847 = vmatprep.subr.mxu0 0.0
        %848 = vmatpush1.msra.mxu0 0.0
        %849 = vmatprep.subr.mxu0 0.0
        %850 = vmatpush1.msra.mxu0 0.0
        %851 = vmatprep.subr.mxu0 0.0
        %852 = vmatpush1.msra.mxu0 0.0
        %853 = vmatprep.subr.mxu0 0.0
        %854 = vmatpush1.msra.mxu0 0.0
        %855 = vmatprep.subr.mxu0 0.0
        %856 = vmatpush1.msra.mxu0 0.0
        %857 = vmatprep.subr.mxu0 0.0
        %858 = vmatpush1.msra.mxu0 0.0
        %859 = vmatprep.subr.mxu0 0.0
        %860 = vmatpush1.msra.mxu0 0.0
        %861 = vmatprep.mubr.f32.mxu0 0.0
        %862 = vmatmul.mubr.f32.gmra.mrb[0].mxu0 %v773
        %v863 = vpop.f32.mrb[0].mxu0
        %v864 = vadd.f32 %v795, %v863
        %v865 = vpop.f32.mrb[0].mxu0
        %866 = vdwg.mxu0
        %v867 = vld [vmem:[%s11] sm:$0x1]
        %v868 = vld [vmem:[%s12] sm:$0x1]
        %869 = vadd.xlane.f32.xlu0 %v864
        %v870 = vpop.xlane.xlu0 %869
        %v871 = vmul.f32 %v870, 0.03125
        %v872 = vsub.f32 %v864, %v871
        %vm873 = vcmp.lt.s32.totalorder %v625, 32
        %v874 = vsel %vm873, 1, 0
        %vm875 = vcmp.eq.s32.totalorder %v874, 1
        %v876 = vsel %vm875, %v872, 0.0
        %v877 = vmul.f32 %v876, %v876
        %878 = vadd.xlane.f32.xlu0 %v877
        %v879 = vpop.xlane.xlu0 %878
        %v880 = vmul.f32 %v879, 0.03125
        %v881 = vadd.f32 %v880, 1e-05
        %v882 = vrsqrt.pop %v881
        %v883 = vmul.f32 %v876, %v882
        %v885 = vlaneseq
        %v886 = vshrl.u32 %v885, 7
        %v887 = vsub.s32 0, %v886
        %v888 = vrot.slane %v867, %v887
        %v890 = vmul.f32 %v883, %v888
        %v892 = vlaneseq
        %v893 = vshrl.u32 %v892, 7
        %v894 = vsub.s32 0, %v893
        %v895 = vrot.slane %v868, %v894
        %v897 = vadd.f32 %v890, %v895
        %v898 = vmax.f32 %v897, 0.0
        %v899 = vld [vmem:[#allocation7] sm:$0xff]
        %v900 = vld [vmem:[#allocation7 + $0x8] sm:$0xff]
        %v901 = vld [vmem:[#allocation7 + $0x10] sm:$0xff]
        %v902 = vld [vmem:[#allocation7 + $0x18] sm:$0xff]
        %v903 = vld [vmem:[#allocation7 + $0x20] sm:$0xff]
        %v904 = vld [vmem:[#allocation7 + $0x28] sm:$0xff]
        %v905 = vld [vmem:[#allocation7 + $0x30] sm:$0xff]
        %v906 = vld [vmem:[#allocation7 + $0x38] sm:$0xff]
        %v907 = vld [vmem:[#allocation7 + $0x40] sm:$0xff]
        %v908 = vld [vmem:[#allocation7 + $0x48] sm:$0xff]
        %v909 = vld [vmem:[#allocation7 + $0x50] sm:$0xff]
        %v910 = vld [vmem:[#allocation7 + $0x58] sm:$0xff]
        %v911 = vld [vmem:[#allocation7 + $0x60] sm:$0xff]
        %v912 = vld [vmem:[#allocation7 + $0x68] sm:$0xff]
        %v913 = vld [vmem:[#allocation7 + $0x70] sm:$0xff]
        %v914 = vld [vmem:[#allocation7 + $0x78] sm:$0xff]
        %v915 = vld [vmem:[#allocation7 + $0x80] sm:$0xff]
        %v916 = vld [vmem:[#allocation7 + $0x88] sm:$0xff]
        %v917 = vld [vmem:[#allocation7 + $0x90] sm:$0xff]
        %v918 = vld [vmem:[#allocation7 + $0x98] sm:$0xff]
        %v919 = vld [vmem:[#allocation7 + $0xa0] sm:$0xff]
        %v920 = vld [vmem:[#allocation7 + $0xa8] sm:$0xff]
        %v921 = vld [vmem:[#allocation7 + $0xb0] sm:$0xff]
        %v922 = vld [vmem:[#allocation7 + $0xb8] sm:$0xff]
        %v923 = vld [vmem:[#allocation7 + $0xc0] sm:$0xff]
        %v924 = vld [vmem:[#allocation7 + $0xc8] sm:$0xff]
        %v925 = vld [vmem:[#allocation7 + $0xd0] sm:$0xff]
        %v926 = vld [vmem:[#allocation7 + $0xd8] sm:$0xff]
        %v927 = vld [vmem:[#allocation7 + $0xe0] sm:$0xff]
        %v928 = vld [vmem:[#allocation7 + $0xe8] sm:$0xff]
        %v929 = vld [vmem:[#allocation7 + $0xf0] sm:$0xff]
        %v930 = vld [vmem:[#allocation7 + $0xf8] sm:$0xff]
        %v931 = vld [vmem:[%s14] sm:$0x3]
        %v933 = vlaneseq
        %v934 = vshrl.u32 %v933, 7
        %v935 = vsub.s32 0, %v934
        %v936 = vrot.slane %v931, %v935
        %v937 = vlaneseq
        %v938 = vshrl.u32 %v937, 7
        %v939 = vsub.s32 1, %v938
        %v940 = vrot.slane %v931, %v939
        %943 = vmatprep.subr.mxu0 %v900
        %944 = vmatpush1.msra.mxu0 %v899
        %945 = vmatprep.subr.mxu0 %v902
        %946 = vmatpush1.msra.mxu0 %v901
        %947 = vmatprep.subr.mxu0 %v904
        %948 = vmatpush1.msra.mxu0 %v903
        %949 = vmatprep.subr.mxu0 %v906
        %950 = vmatpush1.msra.mxu0 %v905
        %951 = vmatprep.subr.mxu0 %v908
        %952 = vmatpush1.msra.mxu0 %v907
        %953 = vmatprep.subr.mxu0 %v910
        %954 = vmatpush1.msra.mxu0 %v909
        %955 = vmatprep.subr.mxu0 %v912
        %956 = vmatpush1.msra.mxu0 %v911
        %957 = vmatprep.subr.mxu0 %v914
        %958 = vmatpush1.msra.mxu0 %v913
        %959 = vmatprep.subr.mxu0 %v916
        %960 = vmatpush1.msra.mxu0 %v915
        %961 = vmatprep.subr.mxu0 %v918
        %962 = vmatpush1.msra.mxu0 %v917
        %963 = vmatprep.subr.mxu0 %v920
        %964 = vmatpush1.msra.mxu0 %v919
        %965 = vmatprep.subr.mxu0 %v922
        %966 = vmatpush1.msra.mxu0 %v921
        %967 = vmatprep.subr.mxu0 %v924
        %968 = vmatpush1.msra.mxu0 %v923
        %969 = vmatprep.subr.mxu0 %v926
        %970 = vmatpush1.msra.mxu0 %v925
        %971 = vmatprep.subr.mxu0 %v928
        %972 = vmatpush1.msra.mxu0 %v927
        %973 = vmatprep.subr.mxu0 %v930
        %974 = vmatpush1.msra.mxu0 %v929
        %975 = vmatprep.subr.mxu0 0.0
        %976 = vmatpush1.msra.mxu0 0.0
        %977 = vmatprep.subr.mxu0 0.0
        %978 = vmatpush1.msra.mxu0 0.0
        %979 = vmatprep.subr.mxu0 0.0
        %980 = vmatpush1.msra.mxu0 0.0
        %981 = vmatprep.subr.mxu0 0.0
        %982 = vmatpush1.msra.mxu0 0.0
        %983 = vmatprep.subr.mxu0 0.0
        %984 = vmatpush1.msra.mxu0 0.0
        %985 = vmatprep.subr.mxu0 0.0
        %986 = vmatpush1.msra.mxu0 0.0
        %987 = vmatprep.subr.mxu0 0.0
        %988 = vmatpush1.msra.mxu0 0.0
        %989 = vmatprep.subr.mxu0 0.0
        %990 = vmatpush1.msra.mxu0 0.0
        %991 = vmatprep.subr.mxu0 0.0
        %992 = vmatpush1.msra.mxu0 0.0
        %993 = vmatprep.subr.mxu0 0.0
        %994 = vmatpush1.msra.mxu0 0.0
        %995 = vmatprep.subr.mxu0 0.0
        %996 = vmatpush1.msra.mxu0 0.0
        %997 = vmatprep.subr.mxu0 0.0
        %998 = vmatpush1.msra.mxu0 0.0
        %999 = vmatprep.subr.mxu0 0.0
        %1000 = vmatpush1.msra.mxu0 0.0
        %1001 = vmatprep.subr.mxu0 0.0
        %1002 = vmatpush1.msra.mxu0 0.0
        %1003 = vmatprep.subr.mxu0 0.0
        %1004 = vmatpush1.msra.mxu0 0.0
        %1005 = vmatprep.subr.mxu0 0.0
        %1006 = vmatpush1.msra.mxu0 0.0
        %1007 = vmatprep.mubr.f32.mxu0 0.0
        %1008 = vmatmul.mubr.f32.gmra.mrb[0].mxu0 %v898
        %v1009 = vpop.f32.mrb[0].mxu0
        %v1010 = vadd.f32 %v936, %v1009
        %v1011 = vpop.f32.mrb[0].mxu0
        %v1012 = vadd.f32 %v940, %v1011
        %1013 = vdwg.mxu0
        %v1014 = vtanh.pop %v1010
        %v1015 = vmul.f32 %v1014, 2.0
        %v1016 = vmax.f32 %v1012, -20.0
        %v1017 = vmin.f32 %v1016, 2.0
        %v1018 = vmul.f32 %v1017, 1.442695
        %v1019 = vpow.pop %v1018
        %1020 = vst [vmem:[%s529] sm:$0xff] %v1015
        %1021 = vst [vmem:[%s529 + $0x8] sm:$0xff] %v1019
        %s1022 = sand.u32 %s359, 1
        %s1023 = scalar_lea.sflag [#allocation4], %s1022
        %s1024 = sand.u32 %s359, 1
        %s1025 = smul.addr %s1024, 16
        %s1026 = scalar_lea.vmem [#allocation8], %s1025
        // Predicated region
        $region93: #{tpu_custom_call.1} parent=79 // pred_check
          %p1027 = pneg %p369
        $region94: #{tpu_custom_call.1} parent=79 // pred_check_branch
          %1029 = sbr.rel (%p1027) target = $region96
        $region95: #{tpu_custom_call.1} parent=79 // pred_region
          %s1031 = ssub.s32 256, 256
          %1032 = vsyncadd %s1023, %s1031
          %s1033 = smul.addr %s31, 2
          %s1034 = smul.addr %s1033, 128
          %s1035 = scalar_lea.hbm %s15, %s1034
          %s1037 = sshll.u32 %s1026, 4
          %s1038 = int_to_ptr.vmem [resolvable:$true] %s1037
          %1040 = dma.vmem_to_hbm [thread:$0]  %s1038, 256, %s1035, %s1023
        $region96: #{tpu_custom_call.1} parent=79 // pred_fallthru
          _
      $region80: #{tpu_custom_call.1} parent=5 // pred_fallthru
        _
      %p1041 = scmp.le.s32.totalorder 2, %s26
      // Predicated region
      $region97: #{tpu_custom_call.1} parent=5 // pred_check
        %p1042 = pneg %p1041
      $region98: #{tpu_custom_call.1} parent=5 // pred_check_branch
        %1044 = sbr.rel (%p1042) target = $region100
      $region99: #{tpu_custom_call.1} parent=5 // pred_region
        %s1045 = ssub.s32 %s26, 2
        // Predicated region
        $region101: #{tpu_custom_call.1} parent=99 // pred_check
          %p1046 = pneg %p375
        $region102: #{tpu_custom_call.1} parent=99 // pred_check_branch
          %1048 = sbr.rel (%p1046) target = $region104
        $region103: #{tpu_custom_call.1} parent=99 // pred_region
          %s1049 = sand.u32 %s360, 1
          %s1050 = scalar_lea.sflag [#allocation4], %s1049
          %s1051 = sand.u32 %s360, 1
          %s1052 = smul.addr %s1051, 16
          %s1053 = scalar_lea.vmem [#allocation8], %s1052
          %1054 = dma.done %s1050, 256
        $region104: #{tpu_custom_call.1} parent=99 // pred_fallthru
          _
      $region100: #{tpu_custom_call.1} parent=5 // pred_fallthru
        _
    $region6: #{tpu_custom_call.1} parent=1 // loop_footer
      %s30 = sadd.s32 1, %s26
    $region7: #{tpu_custom_call.1} parent=1 // loop_footer_branch
      %25 = sbr.rel target = $region3
    $region8: #{tpu_custom_call.1} parent=1 // loop_exit
      _
    %1055 = vsyncpa [#allocation3], 1
    %s1056 = scalar_lea.sflag [#allocation3], 1
    %1057 = vsyncpa %s1056, 1
    %1058 = vsyncpa [#allocation6], 1
    %1059 = vsyncpa [#allocation4], 1
    %s1060 = scalar_lea.sflag [#allocation4], 1
    %1061 = vsyncpa %s1060, 1

</llo_original>
